<compile_context>
chip_gen: v7x
topology: tpu7x:2x2x1
jax: 0.10.0
libtpu: 0.0.40
codegen_flags: <defaults>
</compile_context>

<pallas_src>
import functools

import jax
import jax.numpy as jnp
from jax.experimental import pallas as pl
from jax.experimental.pallas import tpu as pltpu


def _attention_kernel(M, N, E, inv_t, map_ref, obs_ref, w_ref, gb_ref, out_ref):
    """One grid step: `bb` independent Attention.forward instances.

    map_ref: (bb, M, E)    obs_ref: (bb, N, E)
    w_ref  : (E, 3E) = [Wq.T | Wk.T | Wv.T]   (pre-transposed, fused once)
    gb_ref : (2, E)  row 0 = gamma, row 1 = beta
    out_ref: (bb, M*E)   lane-dense store; wrapper reshape back is free
    """
    f32 = jnp.float32
    bb = map_ref.shape[0]

    w = w_ref[...].astype(f32)                       # (E, 3E)
    map_x = map_ref[...].astype(f32)                 # (bb, M, E)
    obs_x = obs_ref[...].astype(f32)                 # (bb, N, E)

    # Flatten the batch into the matmul row dim: (bb, M, E) -> (bb*M, E) keeps
    # the minor dim so it is layout-free, and gives the MXU >=128 rows.
    map_proj = jnp.dot(map_x.reshape(bb * M, E), w,
                       preferred_element_type=f32)   # (bb*M, 3E)
    obs_proj = jnp.dot(obs_x.reshape(bb * N, E), w,
                       preferred_element_type=f32)   # (bb*N, 3E)

    # Slice each projection exactly once; temperature folded into q once.
    map_q = map_proj[:, 0:E].reshape(bb, M, E) * inv_t
    map_k = map_proj[:, E:2 * E].reshape(bb, M, E)
    map_v = map_proj[:, 2 * E:3 * E].reshape(bb, M, E)
    obs_k = obs_proj[:, E:2 * E].reshape(bb, N, E)
    obs_v = obs_proj[:, 2 * E:3 * E].reshape(bb, N, E)

    # Cross-attention logits per instance (no in-kernel transposes).
    s_obs = jnp.einsum('bme,bne->bmn', map_q, obs_k,
                       preferred_element_type=f32)            # (bb, M, N)
    # Self-attention logit per map row.
    s_self = jnp.sum(map_q * map_k, axis=-1, keepdims=True)   # (bb, M, 1)

    # Softmax over concat([self, obs], -1) without materializing the concat.
    m = jnp.maximum(jnp.max(s_obs, axis=-1, keepdims=True), s_self)
    e_self = jnp.exp(s_self - m)                              # (bb, M, 1)
    e_obs = jnp.exp(s_obs - m)                                # (bb, M, N)
    denom = e_self + jnp.sum(e_obs, axis=-1, keepdims=True)   # (bb, M, 1)
    inv_denom = 1.0 / denom      # exact divide (approx recip cost ~3e-3 error)
    w_self = e_self * inv_denom
    w_obs = e_obs * inv_denom

    # Weighted value combination.
    map_new = w_self * map_v + jnp.einsum('bmn,bne->bme', w_obs, obs_v,
                                          preferred_element_type=f32)

    # Residual + LayerNorm(eps=1e-6) over the embedding axis.
    xr = map_new + map_x
    mu = jnp.mean(xr, axis=-1, keepdims=True)
    xc = xr - mu
    var = jnp.mean(xc * xc, axis=-1, keepdims=True)
    y = xc * jax.lax.rsqrt(var + 1e-6)
    gamma = gb_ref[0, :]
    beta = gb_ref[1, :]
    y = y * gamma + beta

    # Lane-dense store: minor dim M*E (=256 in the example) instead of E=32.
    out_ref[...] = y.reshape(bb, M * E).astype(out_ref.dtype)


def prepare_attention_params(wq, wk, wv, gamma, beta):
    """Hoisted once per model (weights are static): fuse + pre-transpose."""
    w_all = jnp.concatenate([wq.T, wk.T, wv.T], axis=1)   # (E, 3E)
    gb = jnp.stack([gamma, beta], axis=0)                 # (2, E)
    return w_all, gb


def attention_forward(map_code, obs_code, w_all, gb, temperature, block_b=64):
    """Accepts single-instance (M,E)/(N,E) or batched (B,M,E)/(B,N,E) inputs."""
    squeeze = map_code.ndim == 2
    if squeeze:
        map_code = map_code[None]
        obs_code = obs_code[None]
    B, M, E = map_code.shape
    N = obs_code.shape[1]

    bb = max(1, min(block_b, B))
    num_steps = pl.cdiv(B, bb)
    b_pad = num_steps * bb
    if b_pad != B:
        pad = b_pad - B
        map_code = jnp.pad(map_code, ((0, pad), (0, 0), (0, 0)))
        obs_code = jnp.pad(obs_code, ((0, pad), (0, 0), (0, 0)))

    kernel = functools.partial(_attention_kernel, M, N, E,
                               1.0 / float(temperature))

    out = pl.pallas_call(
        kernel,
        out_shape=jax.ShapeDtypeStruct((b_pad, M * E), jnp.float32),
        grid=(num_steps,),
        in_specs=[
            pl.BlockSpec((bb, M, E), lambda b: (b, 0, 0)),
            pl.BlockSpec((bb, N, E), lambda b: (b, 0, 0)),
            # Constant index_map -> weights stay VMEM-resident across steps.
            pl.BlockSpec((E, 3 * E), lambda b: (0, 0)),
            pl.BlockSpec((2, E), lambda b: (0, 0)),
        ],
        out_specs=pl.BlockSpec((bb, M * E), lambda b: (b, 0)),
        compiler_params=pltpu.CompilerParams(
            dimension_semantics=("parallel",)),
    )(map_code, obs_code, w_all, gb)

    out = out.reshape(b_pad, M, E)[:B]   # row-major reinterpretation (free)
    return out[0] if squeeze else out


def attention_ref(map_code, obs_code, wq, wk, wv, gamma, beta, temperature):
    """Pure-JAX transcription of the PyTorch forward, for validation."""
    map_v = map_code @ wv.T
    obs_v = obs_code @ wv.T
    map_q = map_code @ wq.T
    map_k = map_code @ wk.T
    obs_k = obs_code @ wk.T
    obs_att = map_q @ obs_k.T
    self_att = jnp.sum(map_q * map_k, axis=-1, keepdims=True)
    whole = jnp.concatenate([self_att, obs_att], axis=-1) / temperature
    w = jax.nn.softmax(whole, axis=-1)
    vals = jnp.concatenate(
        [map_v[:, None, :],
         jnp.broadcast_to(obs_v[None], (map_code.shape[0],) + obs_v.shape)],
        axis=1)
    map_new = jnp.sum(w[..., None] * vals, axis=1)
    x = map_new + map_code
    mu = x.mean(-1, keepdims=True)
    var = ((x - mu) ** 2).mean(-1, keepdims=True)
    return (x - mu) / jnp.sqrt(var + 1e-6) * gamma + beta


if __name__ == "__main__":
    M, N, E = 8, 8, 32                 # map rows, obs rows, embed_size
    B = 128                            # batched instances
    BLOCK_B = 64                       # -> grid=(2,), both v7x TCs busy
    temperature = float(E) ** 0.5

    key = jax.random.PRNGKey(0)
    k_map, k_obs, k_q, k_k, k_v, k_g, k_b = jax.random.split(key, 7)

    map_code_b = jax.random.normal(k_map, (B, M, E), jnp.float32)
    obs_code_b = jax.random.normal(k_obs, (B, N, E), jnp.float32)

    scale = 1.0 / (E ** 0.5)
    wq = jax.random.normal(k_q, (E, E), jnp.float32) * scale
    wk = jax.random.normal(k_k, (E, E), jnp.float32) * scale
    wv = jax.random.normal(k_v, (E, E), jnp.float32) * scale
    gamma = 1.0 + 0.1 * jax.random.normal(k_g, (E,), jnp.float32)
    beta = 0.1 * jax.random.normal(k_b, (E,), jnp.float32)

    # Static weight prep done once (hoisted out of the per-call path).
    w_all, gb_params = prepare_attention_params(wq, wk, wv, gamma, beta)

    # Single-instance path (matches the PyTorch module signature).
    out1 = attention_forward(map_code_b[0], obs_code_b[0], w_all, gb_params,
                             temperature)
    out1 = jax.block_until_ready(out1)
    ref1 = attention_ref(map_code_b[0], obs_code_b[0], wq, wk, wv,
                         gamma, beta, temperature)
    assert out1.shape == (M, E)
    assert jnp.allclose(out1, ref1, rtol=1e-4, atol=1e-4), \
        f"single max abs err {jnp.max(jnp.abs(out1 - ref1))}"

    # Batched path: grid=(cdiv(B, BLOCK_B),), parallel over blocks of instances.
    outb = attention_forward(map_code_b, obs_code_b, w_all, gb_params,
                             temperature, block_b=BLOCK_B)
    outb = jax.block_until_ready(outb)
    refb = jax.vmap(attention_ref,
                    in_axes=(0, 0, None, None, None, None, None, None))(
        map_code_b, obs_code_b, wq, wk, wv, gamma, beta, temperature)
    assert outb.shape == (B, M, E)
    assert jnp.allclose(outb, refb, rtol=1e-4, atol=1e-4), \
        f"batched max abs err {jnp.max(jnp.abs(outb - refb))}"

    print("KERNEL_OK")
</pallas_src>

<mosaic_0001>
module attributes {stable_mosaic.version = 11 : i64} {
  func.func @_attention_kernel(%arg0: i32, %arg1: memref<1x8x32xf32, #tpu.memory_space<vmem>>, %arg2: memref<1x8x32xf32, #tpu.memory_space<vmem>>, %arg3: memref<32x96xf32, #tpu.memory_space<vmem>>, %arg4: memref<2x32xf32, #tpu.memory_space<vmem>>, %arg5: memref<1x256xf32, #tpu.memory_space<vmem>>) attributes {dimension_semantics = [#tpu.dimension_semantics<parallel>], iteration_bounds = array<i64: 1>, scalar_prefetch = 0 : i64, scratch_operands = 0 : i64, tpu.core_type = #tpu.core_type<tc>, window_params = [{transform_indices = @transform_0, window_bounds = array<i64: 1, 8, 32>}, {transform_indices = @transform_1, window_bounds = array<i64: 1, 8, 32>}, {pipeline_mode = #tpu.pipeline_mode<synchronous>, transform_indices = @transform_2, window_bounds = array<i64: 32, 96>}, {pipeline_mode = #tpu.pipeline_mode<synchronous>, transform_indices = @transform_3, window_bounds = array<i64: 2, 32>}, {transform_indices = @transform_4, window_bounds = array<i64: 1, 256>}]} {
    %c0 = arith.constant 0 : index
    %c0_0 = arith.constant 0 : index
    %0 = vector.load %arg3[%c0, %c0_0] : memref<32x96xf32, #tpu.memory_space<vmem>>, vector<32x96xf32>
    %c0_1 = arith.constant 0 : index
    %c0_2 = arith.constant 0 : index
    %c0_3 = arith.constant 0 : index
    %1 = vector.load %arg1[%c0_1, %c0_2, %c0_3] : memref<1x8x32xf32, #tpu.memory_space<vmem>>, vector<1x8x32xf32>
    %c0_4 = arith.constant 0 : index
    %c0_5 = arith.constant 0 : index
    %c0_6 = arith.constant 0 : index
    %2 = vector.load %arg2[%c0_4, %c0_5, %c0_6] : memref<1x8x32xf32, #tpu.memory_space<vmem>>, vector<1x8x32xf32>
    %3 = vector.shape_cast %1 : vector<1x8x32xf32> to vector<8x32xf32>
    %cst = arith.constant dense<0.000000e+00> : vector<8x96xf32>
    %4 = tpu.matmul %3, %0, %cst {dimension_numbers = #tpu.dot_dimension_numbers<[1], [0], [0], [1], [0, 0, 1, 1], [], []>} : vector<8x32xf32>, vector<32x96xf32>, vector<8x96xf32> -> vector<8x96xf32>
    %5 = vector.shape_cast %2 : vector<1x8x32xf32> to vector<8x32xf32>
    %cst_7 = arith.constant dense<0.000000e+00> : vector<8x96xf32>
    %6 = tpu.matmul %5, %0, %cst_7 {dimension_numbers = #tpu.dot_dimension_numbers<[1], [0], [0], [1], [0, 0, 1, 1], [], []>} : vector<8x32xf32>, vector<32x96xf32>, vector<8x96xf32> -> vector<8x96xf32>
    %7 = vector.extract_strided_slice %4 {offsets = [0, 0], sizes = [8, 32], strides = [1, 1]} : vector<8x96xf32> to vector<8x32xf32>
    %8 = vector.shape_cast %7 : vector<8x32xf32> to vector<1x8x32xf32>
    %cst_8 = arith.constant 0.176776692 : f32
    %9 = vector.broadcast %cst_8 : f32 to vector<1x8x32xf32>
    %10 = arith.mulf %8, %9 : vector<1x8x32xf32>
    %11 = vector.extract_strided_slice %4 {offsets = [0, 32], sizes = [8, 32], strides = [1, 1]} : vector<8x96xf32> to vector<8x32xf32>
    %12 = vector.shape_cast %11 : vector<8x32xf32> to vector<1x8x32xf32>
    %13 = vector.extract_strided_slice %4 {offsets = [0, 64], sizes = [8, 32], strides = [1, 1]} : vector<8x96xf32> to vector<8x32xf32>
    %14 = vector.shape_cast %13 : vector<8x32xf32> to vector<1x8x32xf32>
    %15 = vector.extract_strided_slice %6 {offsets = [0, 32], sizes = [8, 32], strides = [1, 1]} : vector<8x96xf32> to vector<8x32xf32>
    %16 = vector.shape_cast %15 : vector<8x32xf32> to vector<1x8x32xf32>
    %17 = vector.extract_strided_slice %6 {offsets = [0, 64], sizes = [8, 32], strides = [1, 1]} : vector<8x96xf32> to vector<8x32xf32>
    %18 = vector.shape_cast %17 : vector<8x32xf32> to vector<1x8x32xf32>
    "tpu.trace_start"() <{level = 10 : i32, message = "bme,bne->bmn"}> : () -> ()
    %cst_9 = arith.constant dense<0.000000e+00> : vector<1x8x8xf32>
    %19 = tpu.matmul %10, %16, %cst_9 {dimension_numbers = #tpu.dot_dimension_numbers<[2], [2], [1], [1], [0, 0, 0, 1, 1, 1], [0], [0]>} : vector<1x8x32xf32>, vector<1x8x32xf32>, vector<1x8x8xf32> -> vector<1x8x8xf32>
    "tpu.trace_stop"() : () -> ()
    %20 = arith.mulf %10, %12 : vector<1x8x32xf32>
    %cst_10 = arith.constant dense<0.000000e+00> : vector<1x8xf32>
    %21 = vector.multi_reduction <add>, %20, %cst_10 [2] : vector<1x8x32xf32> to vector<1x8xf32>
    %22 = vector.shape_cast %21 : vector<1x8xf32> to vector<1x8x1xf32>
    %cst_11 = arith.constant dense<0xFF800000> : vector<1x8xf32>
    %23 = vector.multi_reduction <maximumf>, %19, %cst_11 [2] : vector<1x8x8xf32> to vector<1x8xf32>
    %24 = vector.shape_cast %23 : vector<1x8xf32> to vector<1x8x1xf32>
    %25 = arith.maximumf %24, %22 : vector<1x8x1xf32>
    %26 = arith.subf %22, %25 : vector<1x8x1xf32>
    %27 = math.exp %26 : vector<1x8x1xf32>
    %28 = vector.broadcast %25 : vector<1x8x1xf32> to vector<1x8x8xf32>
    %29 = arith.subf %19, %28 : vector<1x8x8xf32>
    %30 = math.exp %29 : vector<1x8x8xf32>
    %cst_12 = arith.constant dense<0.000000e+00> : vector<1x8xf32>
    %31 = vector.multi_reduction <add>, %30, %cst_12 [2] : vector<1x8x8xf32> to vector<1x8xf32>
    %32 = vector.shape_cast %31 : vector<1x8xf32> to vector<1x8x1xf32>
    %33 = arith.addf %27, %32 : vector<1x8x1xf32>
    %cst_13 = arith.constant 1.000000e+00 : f32
    %34 = vector.broadcast %cst_13 : f32 to vector<1x8x1xf32>
    %35 = arith.divf %34, %33 : vector<1x8x1xf32>
    %36 = arith.mulf %27, %35 : vector<1x8x1xf32>
    %37 = vector.broadcast %35 : vector<1x8x1xf32> to vector<1x8x8xf32>
    %38 = arith.mulf %30, %37 : vector<1x8x8xf32>
    %39 = vector.broadcast %36 : vector<1x8x1xf32> to vector<1x8x32xf32>
    %40 = arith.mulf %39, %14 : vector<1x8x32xf32>
    "tpu.trace_start"() <{level = 10 : i32, message = "bmn,bne->bme"}> : () -> ()
    %cst_14 = arith.constant dense<0.000000e+00> : vector<1x8x32xf32>
    %41 = tpu.matmul %38, %18, %cst_14 {dimension_numbers = #tpu.dot_dimension_numbers<[2], [1], [1], [2], [0, 0, 0, 1, 1, 2], [0], [0]>} : vector<1x8x8xf32>, vector<1x8x32xf32>, vector<1x8x32xf32> -> vector<1x8x32xf32>
    "tpu.trace_stop"() : () -> ()
    %42 = arith.addf %40, %41 : vector<1x8x32xf32>
    %43 = arith.addf %42, %1 : vector<1x8x32xf32>
    %cst_15 = arith.constant dense<0.000000e+00> : vector<1x8xf32>
    %44 = vector.multi_reduction <add>, %43, %cst_15 [2] : vector<1x8x32xf32> to vector<1x8xf32>
    %45 = vector.shape_cast %44 : vector<1x8xf32> to vector<1x8x1xf32>
    %cst_16 = arith.constant 3.200000e+01 : f32
    %46 = vector.broadcast %cst_16 : f32 to vector<1x8x1xf32>
    %47 = arith.divf %45, %46 : vector<1x8x1xf32>
    %48 = vector.broadcast %47 : vector<1x8x1xf32> to vector<1x8x32xf32>
    %49 = arith.subf %43, %48 : vector<1x8x32xf32>
    %50 = arith.mulf %49, %49 : vector<1x8x32xf32>
    %cst_17 = arith.constant dense<0.000000e+00> : vector<1x8xf32>
    %51 = vector.multi_reduction <add>, %50, %cst_17 [2] : vector<1x8x32xf32> to vector<1x8xf32>
    %52 = vector.shape_cast %51 : vector<1x8xf32> to vector<1x8x1xf32>
    %cst_18 = arith.constant 3.200000e+01 : f32
    %53 = vector.broadcast %cst_18 : f32 to vector<1x8x1xf32>
    %54 = arith.divf %52, %53 : vector<1x8x1xf32>
    %cst_19 = arith.constant 9.99999997E-7 : f32
    %55 = vector.broadcast %cst_19 : f32 to vector<1x8x1xf32>
    %56 = arith.addf %54, %55 : vector<1x8x1xf32>
    %57 = math.rsqrt %56 : vector<1x8x1xf32>
    %58 = vector.broadcast %57 : vector<1x8x1xf32> to vector<1x8x32xf32>
    %59 = arith.mulf %49, %58 : vector<1x8x32xf32>
    %c0_20 = arith.constant 0 : index
    %c0_21 = arith.constant 0 : index
    %60 = vector.load %arg4[%c0_20, %c0_21] : memref<2x32xf32, #tpu.memory_space<vmem>>, vector<1x32xf32>
    %61 = vector.shape_cast %60 : vector<1x32xf32> to vector<32xf32>
    %c1 = arith.constant 1 : index
    %c0_22 = arith.constant 0 : index
    %62 = vector.load %arg4[%c1, %c0_22] : memref<2x32xf32, #tpu.memory_space<vmem>>, vector<1x32xf32>
    %63 = vector.shape_cast %62 : vector<1x32xf32> to vector<32xf32>
    %64 = vector.shape_cast %61 : vector<32xf32> to vector<1x1x32xf32>
    %65 = vector.broadcast %64 : vector<1x1x32xf32> to vector<1x8x32xf32>
    %66 = arith.mulf %59, %65 : vector<1x8x32xf32>
    %67 = vector.shape_cast %63 : vector<32xf32> to vector<1x1x32xf32>
    %68 = vector.broadcast %67 : vector<1x1x32xf32> to vector<1x8x32xf32>
    %69 = arith.addf %66, %68 : vector<1x8x32xf32>
    %70 = vector.shape_cast %69 : vector<1x8x32xf32> to vector<1x256xf32>
    %c0_23 = arith.constant 0 : index
    %c0_24 = arith.constant 0 : index
    %71 = vector.load %arg5[%c0_23, %c0_24] : memref<1x256xf32, #tpu.memory_space<vmem>>, vector<1x256xf32>
    tpu.vector_store %arg5[%c0_23, %c0_24], %70 {strides = array<i32>} : memref<1x256xf32, #tpu.memory_space<vmem>>, vector<1x256xf32>,
    return
  }
  func.func @transform_0(%arg0: i32) -> (i32, i32, i32) {
    %c0_i32 = arith.constant 0 : i32
    %c0_i32_0 = arith.constant 0 : i32
    %c0_i32_1 = arith.constant 0 : i32
    return %arg0, %c0_i32, %c0_i32_0 : i32, i32, i32
  }
  func.func @transform_1(%arg0: i32) -> (i32, i32, i32) {
    %c0_i32 = arith.constant 0 : i32
    %c0_i32_0 = arith.constant 0 : i32
    %c0_i32_1 = arith.constant 0 : i32
    return %arg0, %c0_i32, %c0_i32_0 : i32, i32, i32
  }
  func.func @transform_2(%arg0: i32) -> (i32, i32) {
    %c0_i32 = arith.constant 0 : i32
    %c0_i32_0 = arith.constant 0 : i32
    %c0_i32_1 = arith.constant 0 : i32
    return %c0_i32, %c0_i32_0 : i32, i32
  }
  func.func @transform_3(%arg0: i32) -> (i32, i32) {
    %c0_i32 = arith.constant 0 : i32
    %c0_i32_0 = arith.constant 0 : i32
    %c0_i32_1 = arith.constant 0 : i32
    return %c0_i32, %c0_i32_0 : i32, i32
  }
  func.func @transform_4(%arg0: i32) -> (i32, i32) {
    %c0_i32 = arith.constant 0 : i32
    %c0_i32_0 = arith.constant 0 : i32
    return %arg0, %c0_i32 : i32, i32
  }
}

</mosaic_0001>

<llo_original>
// kernel: tpu_custom_call.1
$region0: #{tpu_custom_call.1}
  #allocation0 [shape = 'u32[]', space=smem, size = 0x4, offset = 0x4, fixed_abs, tag = 'smem constant byte address 0x4 - core index']
  #allocation1 [shape = 'u32[144,128]{1,0:T(1,128)}', space=vmem, size = 0x12000, scoped, tag = 'internal scratch']
  %s0 = inlined_call_operand.hbm [shape: f32[1,8,32], index: 0, kind: input, shape index: {}]
  %s1 = inlined_call_operand.hbm [shape: f32[1,8,32], index: 1, kind: input, shape index: {}]
  %s2 = inlined_call_operand.hbm [shape: f32[32,96], index: 2, kind: input, shape index: {}]
  %s3 = inlined_call_operand.vmem [shape: f32[2,32], index: 3, kind: input, shape index: {}]
  %s4 = inlined_call_operand.hbm [shape: f32[1,256], index: 4, kind: output, shape index: {}]
  %s5 = sld [smem:[#allocation0]]
  $region38: #{tpu_custom_call.1} parent=0
    _
  %s7 = ssub.s32 1, %s5
  %s8 = scalar_select 0, %s7, %s5
  $region1: #{tpu_custom_call.1} parent=0
    #allocation2 [shape = 'u8[4096]{0}', space=vmem, size = 0x1000, scoped, tag = 'input window, operand 0, single buffered']
    #allocation3 [shape = 's32[1]{0}', space=sflag, size = 0x4, scoped, tag = 'scoped memory for tpu_custom_call.1']
    #allocation4 [shape = 's32[1]{0}', space=sflag, size = 0x4, scoped, tag = 'scoped memory for tpu_custom_call.1']
    #allocation5 [shape = 'u8[4096]{0}', space=vmem, size = 0x1000, scoped, tag = 'input window, operand 1, single buffered']
    #allocation6 [shape = 's32[1]{0}', space=sflag, size = 0x4, scoped, tag = 'scoped memory for tpu_custom_call.1']
    #allocation7 [shape = 'u8[16384]{0}', space=vmem, size = 0x4000, scoped, tag = 'input window, operand 2, single buffered']
    #allocation8 [shape = 'u8[1024]{0}', space=vmem, size = 0x400, scoped, tag = 'output window, operand 0, single buffered']
    %9 = vsyncpa [#allocation3], 0
    %10 = vsyncpa [#allocation6], 0
    %11 = vsyncpa [#allocation4], 0
    // Predicated region
    $region2: #{tpu_custom_call.1} parent=1 // pred_check
      _
    $region3: #{tpu_custom_call.1} parent=1 // pred_check_branch
      %13 = sbr.rel (0) target = $region5
    $region4: #{tpu_custom_call.1} parent=1 // pred_region
      %s15 = ssub.s32 128, 128
      %16 = vsyncadd [#allocation3], %s15
      %s18 = sshll.u32 [#allocation2], 4
      %s19 = int_to_ptr.vmem [resolvable:$true] %s18
      %21 = dma.hbm_to_vmem [thread:$0]  %s0, 128, %s19, [#allocation3]
    $region5: #{tpu_custom_call.1} parent=1 // pred_fallthru
      _
    // Predicated region
    $region6: #{tpu_custom_call.1} parent=1 // pred_check
      _
    $region7: #{tpu_custom_call.1} parent=1 // pred_check_branch
      %23 = sbr.rel (0) target = $region9
    $region8: #{tpu_custom_call.1} parent=1 // pred_region
      %s25 = ssub.s32 128, 128
      %26 = vsyncadd [#allocation6], %s25
      %s28 = sshll.u32 [#allocation5], 4
      %s29 = int_to_ptr.vmem [resolvable:$true] %s28
      %31 = dma.hbm_to_vmem [thread:$0]  %s1, 128, %s29, [#allocation6]
    $region9: #{tpu_custom_call.1} parent=1 // pred_fallthru
      _
    // Predicated region
    $region10: #{tpu_custom_call.1} parent=1 // pred_check
      _
    $region11: #{tpu_custom_call.1} parent=1 // pred_check_branch
      %33 = sbr.rel (0) target = $region13
    $region12: #{tpu_custom_call.1} parent=1 // pred_region
      %s35 = ssub.s32 512, 512
      %36 = vsyncadd [#allocation6], %s35
      %s37 = sshll.u32 [#allocation7], 4
      %s38 = int_to_ptr.vmem [resolvable:$true] %s37
      %43 = dma.hbm_to_vmem [thread:$0]  %s2, 512, %s38, [#allocation6], 128, 128, 8
    $region13: #{tpu_custom_call.1} parent=1 // pred_fallthru
      _
    // Predicated region
    $region14: #{tpu_custom_call.1} parent=1 // pred_check
      _
    $region15: #{tpu_custom_call.1} parent=1 // pred_check_branch
      %45 = sbr.rel (0) target = $region17
    $region16: #{tpu_custom_call.1} parent=1 // pred_region
      _
    $region17: #{tpu_custom_call.1} parent=1 // pred_fallthru
      _
    // Predicated region
    $region18: #{tpu_custom_call.1} parent=1 // pred_check
      _
    $region19: #{tpu_custom_call.1} parent=1 // pred_check_branch
      %47 = sbr.rel (0) target = $region21
    $region20: #{tpu_custom_call.1} parent=1 // pred_region
      %48 = dma.done [#allocation3], 128
    $region21: #{tpu_custom_call.1} parent=1 // pred_fallthru
      _
    // Predicated region
    $region22: #{tpu_custom_call.1} parent=1 // pred_check
      _
    $region23: #{tpu_custom_call.1} parent=1 // pred_check_branch
      %50 = sbr.rel (0) target = $region25
    $region24: #{tpu_custom_call.1} parent=1 // pred_region
      %51 = dma.done [#allocation6], 128
    $region25: #{tpu_custom_call.1} parent=1 // pred_fallthru
      _
    // Predicated region
    $region26: #{tpu_custom_call.1} parent=1 // pred_check
      _
    $region27: #{tpu_custom_call.1} parent=1 // pred_check_branch
      %53 = sbr.rel (0) target = $region29
    $region28: #{tpu_custom_call.1} parent=1 // pred_region
      %54 = dma.done [#allocation6], 512
    $region29: #{tpu_custom_call.1} parent=1 // pred_fallthru
      _
    %v55 = vld [vmem:[#allocation7] sm:$0xff]
    %v56 = vld [vmem:[#allocation7 + $0x8] sm:$0xff]
    %v57 = vld [vmem:[#allocation7 + $0x10] sm:$0xff]
    %v58 = vld [vmem:[#allocation7 + $0x18] sm:$0xff]
    %v59 = vld [vmem:[#allocation2] sm:$0xff]
    %v60 = vld [vmem:[#allocation5] sm:$0xff]
    %vm61 = vcmask 261120
    %v63 = vsel %vm61, %v59, 0
    %65 = vmatprep.subr.mxu0 0.0
    %66 = vmatpush1.msra.mxu0 %v55
    %67 = vmatprep.subr.mxu0 0.0
    %68 = vmatpush1.msra.mxu0 %v56
    %69 = vmatprep.subr.mxu0 0.0
    %70 = vmatpush1.msra.mxu0 %v57
    %71 = vmatprep.subr.mxu0 0.0
    %72 = vmatpush1.msra.mxu0 %v58
    %73 = vmatprep.subr.mxu0 0.0
    %74 = vmatpush1.msra.mxu0 0.0
    %75 = vmatprep.subr.mxu0 0.0
    %76 = vmatpush1.msra.mxu0 0.0
    %77 = vmatprep.subr.mxu0 0.0
    %78 = vmatpush1.msra.mxu0 0.0
    %79 = vmatprep.subr.mxu0 0.0
    %80 = vmatpush1.msra.mxu0 0.0
    %81 = vmatprep.subr.mxu0 0.0
    %82 = vmatpush1.msra.mxu0 0.0
    %83 = vmatprep.subr.mxu0 0.0
    %84 = vmatpush1.msra.mxu0 0.0
    %85 = vmatprep.subr.mxu0 0.0
    %86 = vmatpush1.msra.mxu0 0.0
    %87 = vmatprep.subr.mxu0 0.0
    %88 = vmatpush1.msra.mxu0 0.0
    %89 = vmatprep.subr.mxu0 0.0
    %90 = vmatpush1.msra.mxu0 0.0
    %91 = vmatprep.subr.mxu0 0.0
    %92 = vmatpush1.msra.mxu0 0.0
    %93 = vmatprep.subr.mxu0 0.0
    %94 = vmatpush1.msra.mxu0 0.0
    %95 = vmatprep.subr.mxu0 0.0
    %96 = vmatpush1.msra.mxu0 0.0
    %97 = vmatprep.subr.mxu0 0.0
    %98 = vmatpush1.msra.mxu0 0.0
    %99 = vmatprep.subr.mxu0 0.0
    %100 = vmatpush1.msra.mxu0 0.0
    %101 = vmatprep.subr.mxu0 0.0
    %102 = vmatpush1.msra.mxu0 0.0
    %103 = vmatprep.subr.mxu0 0.0
    %104 = vmatpush1.msra.mxu0 0.0
    %105 = vmatprep.subr.mxu0 0.0
    %106 = vmatpush1.msra.mxu0 0.0
    %107 = vmatprep.subr.mxu0 0.0
    %108 = vmatpush1.msra.mxu0 0.0
    %109 = vmatprep.subr.mxu0 0.0
    %110 = vmatpush1.msra.mxu0 0.0
    %111 = vmatprep.subr.mxu0 0.0
    %112 = vmatpush1.msra.mxu0 0.0
    %113 = vmatprep.subr.mxu0 0.0
    %114 = vmatpush1.msra.mxu0 0.0
    %115 = vmatprep.subr.mxu0 0.0
    %116 = vmatpush1.msra.mxu0 0.0
    %117 = vmatprep.subr.mxu0 0.0
    %118 = vmatpush1.msra.mxu0 0.0
    %119 = vmatprep.subr.mxu0 0.0
    %120 = vmatpush1.msra.mxu0 0.0
    %121 = vmatprep.subr.mxu0 0.0
    %122 = vmatpush1.msra.mxu0 0.0
    %123 = vmatprep.subr.mxu0 0.0
    %124 = vmatpush1.msra.mxu0 0.0
    %125 = vmatprep.subr.mxu0 0.0
    %126 = vmatpush1.msra.mxu0 0.0
    %127 = vmatprep.subr.mxu0 0.0
    %128 = vmatpush1.msra.mxu0 0.0
    %129 = vmatprep.mubr.f32.mxu0 0.0
    %130 = vmatmul.mubr.f32.gmra.mrb[0].mxu0 %v63
    %v131 = vpop.f32.mrb[0].mxu0
    %v132 = vadd.f32 0.0, %v131
    %v133 = vpop.f32.mrb[0].mxu0
    %134 = vdwg.mxu0
    %v136 = vsel %vm61, %v60, 0
    %138 = vmatprep.subr.mxu0 0.0
    %139 = vmatpush1.msra.mxu0 %v55
    %140 = vmatprep.subr.mxu0 0.0
    %141 = vmatpush1.msra.mxu0 %v56
    %142 = vmatprep.subr.mxu0 0.0
    %143 = vmatpush1.msra.mxu0 %v57
    %144 = vmatprep.subr.mxu0 0.0
    %145 = vmatpush1.msra.mxu0 %v58
    %146 = vmatprep.subr.mxu0 0.0
    %147 = vmatpush1.msra.mxu0 0.0
    %148 = vmatprep.subr.mxu0 0.0
    %149 = vmatpush1.msra.mxu0 0.0
    %150 = vmatprep.subr.mxu0 0.0
    %151 = vmatpush1.msra.mxu0 0.0
    %152 = vmatprep.subr.mxu0 0.0
    %153 = vmatpush1.msra.mxu0 0.0
    %154 = vmatprep.subr.mxu0 0.0
    %155 = vmatpush1.msra.mxu0 0.0
    %156 = vmatprep.subr.mxu0 0.0
    %157 = vmatpush1.msra.mxu0 0.0
    %158 = vmatprep.subr.mxu0 0.0
    %159 = vmatpush1.msra.mxu0 0.0
    %160 = vmatprep.subr.mxu0 0.0
    %161 = vmatpush1.msra.mxu0 0.0
    %162 = vmatprep.subr.mxu0 0.0
    %163 = vmatpush1.msra.mxu0 0.0
    %164 = vmatprep.subr.mxu0 0.0
    %165 = vmatpush1.msra.mxu0 0.0
    %166 = vmatprep.subr.mxu0 0.0
    %167 = vmatpush1.msra.mxu0 0.0
    %168 = vmatprep.subr.mxu0 0.0
    %169 = vmatpush1.msra.mxu0 0.0
    %170 = vmatprep.subr.mxu0 0.0
    %171 = vmatpush1.msra.mxu0 0.0
    %172 = vmatprep.subr.mxu0 0.0
    %173 = vmatpush1.msra.mxu0 0.0
    %174 = vmatprep.subr.mxu0 0.0
    %175 = vmatpush1.msra.mxu0 0.0
    %176 = vmatprep.subr.mxu0 0.0
    %177 = vmatpush1.msra.mxu0 0.0
    %178 = vmatprep.subr.mxu0 0.0
    %179 = vmatpush1.msra.mxu0 0.0
    %180 = vmatprep.subr.mxu0 0.0
    %181 = vmatpush1.msra.mxu0 0.0
    %182 = vmatprep.subr.mxu0 0.0
    %183 = vmatpush1.msra.mxu0 0.0
    %184 = vmatprep.subr.mxu0 0.0
    %185 = vmatpush1.msra.mxu0 0.0
    %186 = vmatprep.subr.mxu0 0.0
    %187 = vmatpush1.msra.mxu0 0.0
    %188 = vmatprep.subr.mxu0 0.0
    %189 = vmatpush1.msra.mxu0 0.0
    %190 = vmatprep.subr.mxu0 0.0
    %191 = vmatpush1.msra.mxu0 0.0
    %192 = vmatprep.subr.mxu0 0.0
    %193 = vmatpush1.msra.mxu0 0.0
    %194 = vmatprep.subr.mxu0 0.0
    %195 = vmatpush1.msra.mxu0 0.0
    %196 = vmatprep.subr.mxu0 0.0
    %197 = vmatpush1.msra.mxu0 0.0
    %198 = vmatprep.subr.mxu0 0.0
    %199 = vmatpush1.msra.mxu0 0.0
    %200 = vmatprep.subr.mxu0 0.0
    %201 = vmatpush1.msra.mxu0 0.0
    %202 = vmatprep.mubr.f32.mxu0 0.0
    %203 = vmatmul.mubr.f32.gmra.mrb[0].mxu0 %v136
    %v204 = vpop.f32.mrb[0].mxu0
    %v205 = vadd.f32 0.0, %v204
    %v206 = vpop.f32.mrb[0].mxu0
    %207 = vdwg.mxu0
    %v208 = vmul.f32 %v132, 0.17677669
    %210 = vrot.lane.b32.xlu0 %v205, 96
    %v211 = vpop.permute.xlu0 %210
    %v213 = vsel %vm61, %v208, 0
    %v215 = vsel %vm61, %v211, 0
    %217 = vmatprep.subr.mxu0 0.0
    %218 = vmatpush1.xpose.msra.mxu0 %v215
    %219 = vmatprep.subr.mxu0 0.0
    %220 = vmatpush1.xpose.msra.mxu0 0.0
    %221 = vmatprep.subr.mxu0 0.0
    %222 = vmatpush1.xpose.msra.mxu0 0.0
    %223 = vmatprep.subr.mxu0 0.0
    %224 = vmatpush1.xpose.msra.mxu0 0.0
    %225 = vmatprep.subr.mxu0 0.0
    %226 = vmatpush1.xpose.msra.mxu0 0.0
    %227 = vmatprep.subr.mxu0 0.0
    %228 = vmatpush1.xpose.msra.mxu0 0.0
    %229 = vmatprep.subr.mxu0 0.0
    %230 = vmatpush1.xpose.msra.mxu0 0.0
    %231 = vmatprep.subr.mxu0 0.0
    %232 = vmatpush1.xpose.msra.mxu0 0.0
    %233 = vmatprep.subr.mxu0 0.0
    %234 = vmatpush1.xpose.msra.mxu0 0.0
    %235 = vmatprep.subr.mxu0 0.0
    %236 = vmatpush1.xpose.msra.mxu0 0.0
    %237 = vmatprep.subr.mxu0 0.0
    %238 = vmatpush1.xpose.msra.mxu0 0.0
    %239 = vmatprep.subr.mxu0 0.0
    %240 = vmatpush1.xpose.msra.mxu0 0.0
    %241 = vmatprep.subr.mxu0 0.0
    %242 = vmatpush1.xpose.msra.mxu0 0.0
    %243 = vmatprep.subr.mxu0 0.0
    %244 = vmatpush1.xpose.msra.mxu0 0.0
    %245 = vmatprep.subr.mxu0 0.0
    %246 = vmatpush1.xpose.msra.mxu0 0.0
    %247 = vmatprep.subr.mxu0 0.0
    %248 = vmatpush1.xpose.msra.mxu0 0.0
    %249 = vmatprep.subr.mxu0 0.0
    %250 = vmatpush1.xpose.msra.mxu0 0.0
    %251 = vmatprep.subr.mxu0 0.0
    %252 = vmatpush1.xpose.msra.mxu0 0.0
    %253 = vmatprep.subr.mxu0 0.0
    %254 = vmatpush1.xpose.msra.mxu0 0.0
    %255 = vmatprep.subr.mxu0 0.0
    %256 = vmatpush1.xpose.msra.mxu0 0.0
    %257 = vmatprep.subr.mxu0 0.0
    %258 = vmatpush1.xpose.msra.mxu0 0.0
    %259 = vmatprep.subr.mxu0 0.0
    %260 = vmatpush1.xpose.msra.mxu0 0.0
    %261 = vmatprep.subr.mxu0 0.0
    %262 = vmatpush1.xpose.msra.mxu0 0.0
    %263 = vmatprep.subr.mxu0 0.0
    %264 = vmatpush1.xpose.msra.mxu0 0.0
    %265 = vmatprep.subr.mxu0 0.0
    %266 = vmatpush1.xpose.msra.mxu0 0.0
    %267 = vmatprep.subr.mxu0 0.0
    %268 = vmatpush1.xpose.msra.mxu0 0.0
    %269 = vmatprep.subr.mxu0 0.0
    %270 = vmatpush1.xpose.msra.mxu0 0.0
    %271 = vmatprep.subr.mxu0 0.0
    %272 = vmatpush1.xpose.msra.mxu0 0.0
    %273 = vmatprep.subr.mxu0 0.0
    %274 = vmatpush1.xpose.msra.mxu0 0.0
    %275 = vmatprep.subr.mxu0 0.0
    %276 = vmatpush1.xpose.msra.mxu0 0.0
    %277 = vmatprep.subr.mxu0 0.0
    %278 = vmatpush1.xpose.msra.mxu0 0.0
    %279 = vmatprep.subr.mxu0 0.0
    %280 = vmatpush1.xpose.msra.mxu0 0.0
    %281 = vmatprep.mubr.f32.mxu0 0.0
    %282 = vmatmul.mubr.f32.gmra.mrb[0].mxu0 %v213
    %v283 = vpop.f32.mrb[0].mxu0
    %v284 = vadd.f32 0.0, %v283
    %v285 = vpop.f32.mrb[0].mxu0
    %286 = vdwg.mxu0
    %288 = vrot.lane.b32.xlu0 %v132, 96
    %v289 = vpop.permute.xlu0 %288
    %v291 = vmul.f32 %v208, %v289
    %v292 = vsel %vm61, %v291, 0.0
    %293 = vadd.xlane.f32.xlu0 %v292
    %v294 = vpop.xlane.xlu0 %293
    %vm295 = vcmask 64512
    %v296 = vsel %vm295, %v284, -inf
    %297 = vmax.xlane.f32.xlu0 %v296
    %v298 = vpop.xlane.xlu0 %297
    %v299 = vmax.f32 %v298, %v294
    %v300 = vsub.f32 %v294, %v299
    %v301 = vmul.f32 %v300, 1.442695
    %v302 = vpow.pop %v301
    %v303 = vsub.f32 %v284, %v299
    %v304 = vmul.f32 %v303, 1.442695
    %v305 = vpow.pop %v304
    %v306 = vsel %vm295, %v305, 0.0
    %307 = vadd.xlane.f32.xlu0 %v306
    %v308 = vpop.xlane.xlu0 %307
    %v309 = vadd.f32 %v302, %v308
    %v310 = vrcp.pop %v309
    %v311 = vmul.f32 1.0, %v310
    %v312 = vmul.f32 %v302, %v311
    %v313 = vmul.f32 %v305, %v311
    %v314 = vmul.f32 %v312, %v132
    %315 = vrot.lane.b32.xlu0 %v205, 64
    %v316 = vpop.permute.xlu0 %315
    %v319 = vsel %vm295, %v313, 0
    %321 = vmatprep.subr.mxu0 0.0
    %322 = vmatpush1.msra.mxu0 %v316
    %323 = vmatprep.subr.mxu0 0.0
    %324 = vmatpush1.msra.mxu0 0.0
    %325 = vmatprep.subr.mxu0 0.0
    %326 = vmatpush1.msra.mxu0 0.0
    %327 = vmatprep.subr.mxu0 0.0
    %328 = vmatpush1.msra.mxu0 0.0
    %329 = vmatprep.subr.mxu0 0.0
    %330 = vmatpush1.msra.mxu0 0.0
    %331 = vmatprep.subr.mxu0 0.0
    %332 = vmatpush1.msra.mxu0 0.0
    %333 = vmatprep.subr.mxu0 0.0
    %334 = vmatpush1.msra.mxu0 0.0
    %335 = vmatprep.subr.mxu0 0.0
    %336 = vmatpush1.msra.mxu0 0.0
    %337 = vmatprep.subr.mxu0 0.0
    %338 = vmatpush1.msra.mxu0 0.0
    %339 = vmatprep.subr.mxu0 0.0
    %340 = vmatpush1.msra.mxu0 0.0
    %341 = vmatprep.subr.mxu0 0.0
    %342 = vmatpush1.msra.mxu0 0.0
    %343 = vmatprep.subr.mxu0 0.0
    %344 = vmatpush1.msra.mxu0 0.0
    %345 = vmatprep.subr.mxu0 0.0
    %346 = vmatpush1.msra.mxu0 0.0
    %347 = vmatprep.subr.mxu0 0.0
    %348 = vmatpush1.msra.mxu0 0.0
    %349 = vmatprep.subr.mxu0 0.0
    %350 = vmatpush1.msra.mxu0 0.0
    %351 = vmatprep.subr.mxu0 0.0
    %352 = vmatpush1.msra.mxu0 0.0
    %353 = vmatprep.subr.mxu0 0.0
    %354 = vmatpush1.msra.mxu0 0.0
    %355 = vmatprep.subr.mxu0 0.0
    %356 = vmatpush1.msra.mxu0 0.0
    %357 = vmatprep.subr.mxu0 0.0
    %358 = vmatpush1.msra.mxu0 0.0
    %359 = vmatprep.subr.mxu0 0.0
    %360 = vmatpush1.msra.mxu0 0.0
    %361 = vmatprep.subr.mxu0 0.0
    %362 = vmatpush1.msra.mxu0 0.0
    %363 = vmatprep.subr.mxu0 0.0
    %364 = vmatpush1.msra.mxu0 0.0
    %365 = vmatprep.subr.mxu0 0.0
    %366 = vmatpush1.msra.mxu0 0.0
    %367 = vmatprep.subr.mxu0 0.0
    %368 = vmatpush1.msra.mxu0 0.0
    %369 = vmatprep.subr.mxu0 0.0
    %370 = vmatpush1.msra.mxu0 0.0
    %371 = vmatprep.subr.mxu0 0.0
    %372 = vmatpush1.msra.mxu0 0.0
    %373 = vmatprep.subr.mxu0 0.0
    %374 = vmatpush1.msra.mxu0 0.0
    %375 = vmatprep.subr.mxu0 0.0
    %376 = vmatpush1.msra.mxu0 0.0
    %377 = vmatprep.subr.mxu0 0.0
    %378 = vmatpush1.msra.mxu0 0.0
    %379 = vmatprep.subr.mxu0 0.0
    %380 = vmatpush1.msra.mxu0 0.0
    %381 = vmatprep.subr.mxu0 0.0
    %382 = vmatpush1.msra.mxu0 0.0
    %383 = vmatprep.subr.mxu0 0.0
    %384 = vmatpush1.msra.mxu0 0.0
    %385 = vmatprep.mubr.f32.mxu0 0.0
    %386 = vmatmul.mubr.f32.gmra.mrb[0].mxu0 %v319
    %v387 = vpop.f32.mrb[0].mxu0
    %v388 = vadd.f32 0.0, %v387
    %v389 = vpop.f32.mrb[0].mxu0
    %390 = vdwg.mxu0
    %392 = vrot.lane.b32.xlu0 %v388, 64
    %v393 = vpop.permute.xlu0 %392
    %v395 = vadd.f32 %v314, %v393
    %396 = vrot.lane.b32.xlu0 %v59, 64
    %v397 = vpop.permute.xlu0 %396
    %v399 = vadd.f32 %v395, %v397
    %401 = vrot.lane.b32.xlu0 %v399, 64
    %v402 = vpop.permute.xlu0 %401
    %v404 = vsel %vm61, %v402, 0.0
    %405 = vadd.xlane.f32.xlu0 %v404
    %v406 = vpop.xlane.xlu0 %405
    %v407 = vrcp.pop 32.0
    %v408 = vmul.f32 %v406, %v407
    %v409 = vsub.f32 %v399, %v408
    %v410 = vmul.f32 %v409, %v409
    %412 = vrot.lane.b32.xlu0 %v410, 64
    %v413 = vpop.permute.xlu0 %412
    %v415 = vsel %vm61, %v413, 0.0
    %416 = vadd.xlane.f32.xlu0 %v415
    %v417 = vpop.xlane.xlu0 %416
    %v418 = vmul.f32 %v417, %v407
    %v419 = vadd.f32 %v418, 1e-06
    %v420 = vrsqrt.pop %v419
    %v421 = vmul.f32 %v409, %v420
    %v422 = vld [vmem:[%s3] sm:$0x1]
    %v423 = vld [vmem:[%s3 + $0x1] sm:$0x1]
    %v424 = vlaneseq
    %v425 = vshrl.u32 %v424, 7
    %v426 = vsub.s32 0, %v425
    %v427 = vrot.slane %v422, %v426
    %429 = vrot.lane.b32.xlu0 %v427, 64
    %v430 = vpop.permute.xlu0 %429
    %v432 = vmul.f32 %v421, %v430
    %v433 = vlaneseq
    %v434 = vshrl.u32 %v433, 7
    %v435 = vsub.s32 0, %v434
    %v436 = vrot.slane %v423, %v435
    %438 = vrot.lane.b32.xlu0 %v436, 64
    %v439 = vpop.permute.xlu0 %438
    %v441 = vadd.f32 %v432, %v439
    %443 = vrot.lane.b32.xlu0 %v441, 64
    %v444 = vpop.permute.xlu0 %443
    %v446 = vcombine.high %v444, 0.0
    %v448 = vunpack.c.l.s4 1983009808
    %v449 = vunpack.c.0.s8 %v448
    %v450 = vlaneseq
    %v451 = vshrl.u32 %v450, 7
    %v452 = vsub.s32 %v449, %v451
    %v453 = vrot.slane %v444, %v452
    %v455 = vunpack.c.l.s4 1983009808
    %v456 = vunpack.c.0.s8 %v455
    %v457 = vlaneseq
    %v458 = vshrl.u32 %v457, 7
    %v459 = vsub.s32 %v456, %v458
    %v460 = vrot.slane %v446, %v459
    %v461 = vcombine.high %v453, 0.0
    %v463 = vunpack.c.l.s4 1934713408
    %v464 = vunpack.c.0.s8 %v463
    %v465 = vlaneseq
    %v466 = vshrl.u32 %v465, 7
    %v467 = vsub.s32 %v464, %v466
    %v468 = vrot.slane %v453, %v467
    %v470 = vunpack.c.l.s4 1934713408
    %v471 = vunpack.c.0.s8 %v470
    %v472 = vlaneseq
    %v473 = vshrl.u32 %v472, 7
    %v474 = vsub.s32 %v471, %v473
    %v475 = vrot.slane %v461, %v474
    %v476 = vcombine.high %v460, 0.0
    %v478 = vunpack.c.l.s4 1934713408
    %v479 = vunpack.c.0.s8 %v478
    %v480 = vlaneseq
    %v481 = vshrl.u32 %v480, 7
    %v482 = vsub.s32 %v479, %v481
    %v483 = vrot.slane %v460, %v482
    %v485 = vunpack.c.l.s4 1934713408
    %v486 = vunpack.c.0.s8 %v485
    %v487 = vlaneseq
    %v488 = vshrl.u32 %v487, 7
    %v489 = vsub.s32 %v486, %v488
    %v490 = vrot.slane %v476, %v489
    %v491 = vcombine.high %v468, 0.0
    %v492 = vcombine.high %v475, 0.0
    %v493 = vcombine.high %v483, 0.0
    %v494 = vcombine.high %v490, 0.0
    %496 = vrot.lane.b32.xlu0 %v491, 32
    %v497 = vpop.permute.xlu0 %496
    %500 = vrot.lane.b32.xlu0 %v475, 64
    %v501 = vpop.permute.xlu0 %500
    %504 = vrot.lane.b32.xlu0 %v492, 96
    %v505 = vpop.permute.xlu0 %504
    %508 = vrot.lane.b32.xlu0 %v493, 32
    %v509 = vpop.permute.xlu0 %508
    %512 = vrot.lane.b32.xlu0 %v490, 64
    %v513 = vpop.permute.xlu0 %512
    %516 = vrot.lane.b32.xlu0 %v494, 96
    %v517 = vpop.permute.xlu0 %516
    %v519 = vsel %vm61, %v468, %v497
    %vm520 = vcmask 523264
    %v521 = vsel %vm520, %v519, %v501
    %vm522 = vcmask 785408
    %v523 = vsel %vm522, %v521, %v505
    %v524 = vsel %vm61, %v483, %v509
    %v525 = vsel %vm520, %v524, %v513
    %v526 = vsel %vm522, %v525, %v517
    %v529 = vcombine.low %v523, %v526
    %v531 = vunpack.c.l.s4 1966171168
    %v532 = vunpack.c.0.s8 %v531
    %v533 = vlaneseq
    %v534 = vshrl.u32 %v533, 7
    %v535 = vsub.s32 %v532, %v534
    %v536 = vrot.slane %v529, %v535
    %v538 = vunpack.c.l.s4 1966171168
    %v539 = vunpack.c.0.s8 %v538
    %v540 = vlaneseq
    %v541 = vshrl.u32 %v540, 7
    %v542 = vsub.s32 %v539, %v541
    %v543 = vrot.slane %v536, %v542
    %v545 = vlaneseq
    %vm546 = vcmp.ge.s32.totalorder %v545, 0
    %vm547 = vcmp.lt.s32.totalorder %v545, 256
    %vm548 = vmand %vm546, %vm547
    %549 = vst.msk [vmem:[#allocation8] sm:$0x3] %vm548, %v543
    // Predicated region
    $region30: #{tpu_custom_call.1} parent=1 // pred_check
      _
    $region31: #{tpu_custom_call.1} parent=1 // pred_check_branch
      %551 = sbr.rel (0) target = $region33
    $region32: #{tpu_custom_call.1} parent=1 // pred_region
      %s553 = ssub.s32 32, 32
      %554 = vsyncadd [#allocation4], %s553
      %s556 = sshll.u32 [#allocation8], 4
      %s557 = int_to_ptr.vmem [resolvable:$true] %s556
      %559 = dma.vmem_to_hbm [thread:$0]  %s557, 32, %s4, [#allocation4]
    $region33: #{tpu_custom_call.1} parent=1 // pred_fallthru
      _
    // Predicated region
    $region34: #{tpu_custom_call.1} parent=1 // pred_check
      _
    $region35: #{tpu_custom_call.1} parent=1 // pred_check_branch
      %561 = sbr.rel (0) target = $region37
    $region36: #{tpu_custom_call.1} parent=1 // pred_region
      %562 = dma.done [#allocation4], 32
    $region37: #{tpu_custom_call.1} parent=1 // pred_fallthru
      _
    %563 = vsyncpa [#allocation3], 1
    %564 = vsyncpa [#allocation6], 1
    %565 = vsyncpa [#allocation4], 1

</llo_original>
